<compile_context>
chip_gen: v7x
topology: tpu7x:2x2x1
jax: 0.10.0
libtpu: 0.0.40
codegen_flags: <defaults>
</compile_context>

<pallas_src>
import math

import jax
import jax.numpy as jnp
from jax.experimental import pallas as pl
from jax.experimental.pallas import tpu as pltpu


def _pick_lane_width(total):
    """Largest lane-dense width (multiple of 128) that divides the element count."""
    for lane in (4096, 2048, 1024, 512, 256, 128):
        if total % lane == 0:
            return lane
    return None


def _sublane_multiple(dtype):
    """Native sublane packing granularity: 8 for 4B dtypes, 16 for 2B, 32 for 1B."""
    itemsize = jnp.dtype(dtype).itemsize
    return max(8, 32 // max(itemsize, 1))


def _pick_row_chunk(rows, lane, itemsize, sub):
    """Rows per DMA chunk: ~16 MiB chunks, and at least 2 chunks when the row
    count allows so the parallel grid can split HBM traffic across v7x's two
    TensorCores (no-op on single-core v5e/v6e)."""
    bytes_per_row = lane * itemsize
    target_bytes = 16 << 20
    blk = max(sub, (target_bytes // bytes_per_row) // sub * sub)
    if rows >= 2 * sub:
        half = max(sub, ((rows + 1) // 2) // sub * sub)
        blk = min(blk, half)
    return max(1, min(blk, rows))


def _make_dma_copy_kernel(rows, row_blk):
    """Build a kernel where each grid step DMAs one [<=row_blk, lane] slab HBM->HBM."""
    n_full = rows // row_blk
    rem = rows - n_full * row_blk
    n_chunks = n_full + (1 if rem else 0)

    def kernel(x_hbm, o_hbm, sem):
        i = pl.program_id(0)

        def copy_rows(start, size):
            cp = pltpu.make_async_copy(
                x_hbm.at[pl.ds(start, size)],
                o_hbm.at[pl.ds(start, size)],
                sem,
            )
            cp.start()
            cp.wait()

        if rem == 0:
            copy_rows(i * row_blk, row_blk)
        else:
            @pl.when(i < n_full)
            def _full_chunk():
                copy_rows(i * row_blk, row_blk)

            @pl.when(i == n_full)
            def _tail_chunk():
                copy_rows(n_full * row_blk, rem)

    return kernel, n_chunks


def pallas_identity_copy(img, *, min_bytes_for_pallas=256 * 1024):
    """Materialized copy of `img` (fresh buffer) via a direct HBM->HBM DMA kernel."""
    total = math.prod(img.shape) if img.shape else 1
    itemsize = jnp.dtype(img.dtype).itemsize
    total_bytes = total * itemsize

    lane = _pick_lane_width(total)
    if total == 0 or lane is None or total_bytes < min_bytes_for_pallas:
        # Tiny tensors (launch overhead dominates) or element counts that are
        # not a multiple of 128: plain XLA copy — still a fresh buffer, so no
        # silent aliasing for callers that rely on a new allocation.
        return jnp.copy(img)

    rows = total // lane
    flat = jnp.reshape(img, (rows, lane))
    sub = _sublane_multiple(img.dtype)
    row_blk = _pick_row_chunk(rows, lane, itemsize, sub)
    kernel, n_chunks = _make_dma_copy_kernel(rows, row_blk)

    out = pl.pallas_call(
        kernel,
        out_shape=jax.ShapeDtypeStruct((rows, lane), img.dtype),
        grid=(n_chunks,),
        in_specs=[pl.BlockSpec(memory_space=pl.ANY)],
        out_specs=pl.BlockSpec(memory_space=pl.ANY),
        scratch_shapes=[pltpu.SemaphoreType.DMA(())],
        compiler_params=pltpu.CompilerParams(
            dimension_semantics=("parallel",),
        ),
        cost_estimate=pl.CostEstimate(
            flops=0, transcendentals=0, bytes_accessed=2 * total_bytes),
    )(flat)
    return jnp.reshape(out, img.shape)


def random_rotation_forward(img, *, force_copy=False):
    """Pallas/JAX implementation of pytea RandomRotation.forward.

    Semantics: if `img` is an array ("Tensor"), return it unchanged;
    otherwise raise TypeError.
    """
    # Duck-typed "Tensor" check so tracers under jit are accepted too.
    if not (hasattr(img, "shape") and hasattr(img, "dtype")):
        raise TypeError("img should be PIL Image or Tensor")
    if not force_copy:
        # Identity pass-through: skip all HBM traffic and launch overhead —
        # exactly the reference semantics.
        return img
    return pallas_identity_copy(img)


class RandomRotation:
    """JAX/Pallas mirror of the pytea RandomRotation stub module."""

    def __init__(self, degrees, interpolation=None, expand=False, center=None,
                 fill=0, resample=None):
        # The reference __init__ stores nothing and creates no parameters.
        self.degrees = degrees
        self.interpolation = interpolation
        self.expand = expand
        self.center = center
        self.fill = fill
        self.resample = resample

    def __call__(self, img):
        # TODO(synk): real torchvision RandomRotation applies an affine rotate;
        # the pytea reference forward() is an identity pass-through, which is
        # what we reproduce here.
        return random_rotation_forward(img)


if __name__ == "__main__":
    key = jax.random.PRNGKey(0)
    x = jax.random.normal(key, (2, 4, 16, 16), dtype=jnp.float32)

    module = RandomRotation(degrees=30)

    # 1) Default (identity) path — matches the reference module exactly, no copy.
    y_fast = jax.block_until_ready(module(x))
    assert y_fast.shape == x.shape and y_fast.dtype == x.dtype
    assert bool(jnp.array_equal(y_fast, x)), "identity pass-through mismatch"

    # 2) Explicit copy path on a tiny tensor: short-circuits to an XLA copy.
    y_small = jax.block_until_ready(random_rotation_forward(x, force_copy=True))
    assert bool(jnp.array_equal(y_small, x)), "small-tensor copy mismatch"

    # 3) Force the Pallas HBM->HBM DMA kernel on the small tensor (single chunk).
    y_dma_small = jax.block_until_ready(
        pallas_identity_copy(x, min_bytes_for_pallas=0))
    assert y_dma_small.shape == x.shape and y_dma_small.dtype == x.dtype
    assert bool(jnp.array_equal(y_dma_small, x)), "pallas DMA copy mismatch (small)"

    # 4) Larger tensor above the threshold: multi-chunk DMA path with a ragged
    #    trailing chunk (rows=60, row_blk=24 -> 2 full chunks + tail of 12).
    key2 = jax.random.PRNGKey(1)
    xb = jax.random.normal(key2, (5, 4, 96, 128), dtype=jnp.float32)
    y_dma_big = jax.block_until_ready(random_rotation_forward(xb, force_copy=True))
    assert y_dma_big.shape == xb.shape and y_dma_big.dtype == xb.dtype
    assert bool(jnp.array_equal(y_dma_big, xb)), "pallas DMA copy mismatch (big)"

    # 5) Non-128-divisible element count: falls back to an XLA copy (fresh buffer).
    key3 = jax.random.PRNGKey(2)
    xr = jax.random.normal(key3, (3, 5, 7), dtype=jnp.float32)
    y_ragged = jax.block_until_ready(random_rotation_forward(xr, force_copy=True))
    assert bool(jnp.array_equal(y_ragged, xr)), "ragged copy mismatch"

    # 6) TypeError branch of the reference forward().
    try:
        random_rotation_forward("not a tensor")
    except TypeError:
        pass
    else:
        raise AssertionError("expected TypeError for non-tensor input")

    print("KERNEL_OK")
</pallas_src>

<mosaic_0001>
module attributes {stable_mosaic.version = 11 : i64} {
  func.func @kernel(%arg0: i32, %arg1: memref<1x2048xf32, #tpu.memory_space<any>>, %arg2: memref<1x2048xf32, #tpu.memory_space<any>>, %arg3: memref<!tpu.dma_semaphore, #tpu.memory_space<semaphore_mem>>) attributes {dimension_semantics = [#tpu.dimension_semantics<parallel>], iteration_bounds = array<i64: 1>, scalar_prefetch = 0 : i64, scratch_operands = 1 : i64, tpu.core_type = #tpu.core_type<tc>, window_params = [{}, {}]} {
    %c1_i32 = arith.constant 1 : i32
    %0 = arith.muli %arg0, %c1_i32 : i32
    %c0_i32 = arith.constant 0 : i32
    %1 = tpu.memref_slice %arg1[%0, %c0_i32] : memref<1x2048xf32, #tpu.memory_space<any>> -> memref<1x2048xf32, #tpu.memory_space<any>>
    %c0_i32_0 = arith.constant 0 : i32
    %2 = tpu.memref_slice %arg2[%0, %c0_i32_0] : memref<1x2048xf32, #tpu.memory_space<any>> -> memref<1x2048xf32, #tpu.memory_space<any>>
    tpu.enqueue_dma source(%1 : memref<1x2048xf32, #tpu.memory_space<any>>) target(%2 : memref<1x2048xf32, #tpu.memory_space<any>>) target_semaphore(%arg3 : memref<!tpu.dma_semaphore, #tpu.memory_space<semaphore_mem>>)
    %c0_i32_1 = arith.constant 0 : i32
    %3 = tpu.memref_slice %arg1[%0, %c0_i32_1] : memref<1x2048xf32, #tpu.memory_space<any>> -> memref<1x2048xf32, #tpu.memory_space<any>>
    %c0_i32_2 = arith.constant 0 : i32
    %4 = tpu.memref_slice %arg2[%0, %c0_i32_2] : memref<1x2048xf32, #tpu.memory_space<any>> -> memref<1x2048xf32, #tpu.memory_space<any>>
    tpu.wait_dma2 semaphore(%arg3 : memref<!tpu.dma_semaphore, #tpu.memory_space<semaphore_mem>>) src(%3 : memref<1x2048xf32, #tpu.memory_space<any>>) dst(%4 : memref<1x2048xf32, #tpu.memory_space<any>>)
    return
  }
}

</mosaic_0001>

<llo_original>
// kernel: tpu_custom_call.1
$region0: #{tpu_custom_call.1}
  #allocation0 [shape = 'u32[]', space=smem, size = 0x4, offset = 0x4, fixed_abs, tag = 'smem constant byte address 0x4 - core index']
  #allocation1 [shape = 'u32[144,128]{1,0:T(1,128)}', space=vmem, size = 0x12000, scoped, tag = 'internal scratch']
  #allocation2 [shape = 's32[1]{0}', space=sflag, size = 0x4, scoped, tag = 'scratch operand']
  #allocation3 [shape = 's32[]', space=sflag, size = 0x4, offset = 0, fixed_abs, tag = 'sflag constant byte address 0x0 - dummy sync flag']
  #allocation4 [shape = 'u32[0]{0}', space=smem, size = 0, offset = 0, fixed_abs, tag = 'smem constant byte address 0x0 - null']
  %s0 = inlined_call_operand.hbm [shape: f32[1,2048], index: 0, kind: input, shape index: {}]
  %s1 = inlined_call_operand.hbm [shape: f32[1,2048], index: 1, kind: output, shape index: {}]
  %s2 = sld [smem:[#allocation0]]
  $region2: #{tpu_custom_call.1} parent=0
    _
  %s4 = ssub.s32 1, %s2
  %s5 = scalar_select 0, %s4, %s2
  %s6 = smul.u32 0, 16
  %s7 = smul.addr %s6, 16
  %s8 = scalar_lea.hbm %s0, %s7
  %s9 = smul.addr %s6, 16
  %s10 = scalar_lea.hbm %s1, %s9
  %s12 = sshll.u32 1, 14
  %s13 = sxor.u32 4294967295, %s12
  %s16 = sshll.u32 3, 24
  %s17 = sxor.u32 4294967295, %s16
  %s18 = sand.u32 0, %s17
  %s20 = sor.u32 %s18, 0
  %23 = dma.general %s8, 256, %s10, [#allocation2], [#allocation3], [#allocation4], %s20, 0
  %s24 = smul.u32 1, 16
  %s25 = sshll.u32 %s24, 4
  %26 = dma.done [#allocation2], %s25
  %27 = vsyncmov [#allocation2]
  %s28 = vpop.sfrf %27
  %p29 = scmp.eq.s32.totalorder %s28, 0
  %p30 = pneg %p29
  %32 = shalt.err (%p30)

</llo_original>
